<compile_context>
chip_gen: v7x
topology: tpu7x:2x2x1
jax: 0.10.0
libtpu: 0.0.40
codegen_flags: <defaults>
</compile_context>

<pallas_src>
import functools

import jax
import jax.numpy as jnp
from jax.experimental import pallas as pl
from jax.experimental.pallas import tpu as pltpu


# ----------------------------- Pallas kernels --------------------------------

def ca_fused_kernel(x_ref, w1t_ref, b1_ref, w2_ref, b2_ref, o_ref, *, inv_hw):
    """Fully fused ChannelAttention for one batch item.

    x_ref : (1, C, HW)  activation plane, lanes = HW (lane-dense)
    w1t   : (C, Cr)     = W1.T  (PyTorch Linear(C, Cr) weight is (Cr, C))
    b1    : (1, Cr)
    w2    : (C, Cr)     = W2    (PyTorch Linear(Cr, C) weight is (C, Cr))
    b2    : (C, 1)
    o_ref : (1, C, HW)
    """
    x = x_ref[0]                                                     # (C, HW)
    # AdaptiveAvgPool2d(1): per-channel spatial mean (XLU lane reduction).
    mean = jnp.sum(x.astype(jnp.float32), axis=1, keepdims=True) * inv_hw  # (C,1)
    # fc1 + ReLU:  h_j = relu(sum_c W1[j,c] * mean_c + b1_j)  -> (1, Cr)
    h = jnp.sum(w1t_ref[...] * mean, axis=0, keepdims=True) + b1_ref[...]
    h = jnp.maximum(h, 0.0)
    # fc2 + sigmoid:  g_c = sigmoid(sum_j W2[c,j] * h_j + b2_c)  -> (C, 1)
    g = jnp.sum(w2_ref[...] * h, axis=1, keepdims=True) + b2_ref[...]
    g = 1.0 / (1.0 + jnp.exp(-g))
    # Scale: gate broadcast along lanes; lane-dense store.
    o_ref[0] = (x * g).astype(o_ref.dtype)


def ca_sum_kernel(x_ref, s_ref):
    """Tiled path, pass 1: per-channel partial sums accumulated across the
    spatial-tile ("arbitrary") grid axis into a resident (C, 1) output block."""
    @pl.when(pl.program_id(1) == 0)
    def _():
        s_ref[...] = jnp.zeros_like(s_ref)

    s_ref[0] += jnp.sum(x_ref[0].astype(jnp.float32), axis=1, keepdims=True)


def ca_scale_kernel(x_ref, g_ref, o_ref):
    """Tiled path, pass 2: out = x * gate (gate broadcast along lanes)."""
    o_ref[0] = (x_ref[0] * g_ref[0]).astype(o_ref.dtype)


# ----------------------------- wrappers ---------------------------------------

def _vmem_limit(nbytes):
    """Explicit scoped-VMEM limit: >= v5e's small default, <= v7x physical."""
    return int(min(64 << 20, max(16 << 20, nbytes)))


def _pick_spatial_tile(hw, c, target_bytes=2 << 20):
    """Largest multiple-of-128 divisor of hw whose (c, t) f32 block stays under
    target_bytes; None if hw has no multiple-of-128 divisor."""
    cap = max(128, target_bytes // (c * 4))
    best = None
    t = 128
    while t <= min(cap, hw):
        if hw % t == 0:
            best = t
        t += 128
    return best


def channel_attention(x, w1, b1, w2, b2, *, force_tiled=False, spatial_tile=None):
    """ChannelAttention forward (eval semantics).

    x  : (B, C, H, W)  NCHW (PyTorch layout)
    w1 : (C//r, C), b1: (C//r,)   -- PyTorch Linear(C, C//r)
    w2 : (C, C//r), b2: (C,)      -- PyTorch Linear(C//r, C)
    """
    B, C, H, W = x.shape
    HW = H * W
    x2 = x.reshape(B, C, HW)                    # free reshape, lanes = HW
    Cr = w1.shape[0]
    plane_bytes = C * HW * x.dtype.itemsize

    tile = spatial_tile if spatial_tile is not None else _pick_spatial_tile(HW, C)
    use_tiled = (force_tiled or plane_bytes > (6 << 20)) and tile is not None

    if not use_tiled:
        # -------- fused path: one read + one write of x, everything in-kernel
        out = pl.pallas_call(
            functools.partial(ca_fused_kernel, inv_hw=1.0 / HW),
            out_shape=jax.ShapeDtypeStruct((B, C, HW), x.dtype),
            grid_spec=pltpu.PrefetchScalarGridSpec(
                num_scalar_prefetch=0,
                grid=(B,),
                in_specs=[
                    pl.BlockSpec((1, C, HW), lambda b: (b, 0, 0)),
                    pl.BlockSpec((C, Cr), lambda b: (0, 0)),
                    pl.BlockSpec((1, Cr), lambda b: (0, 0)),
                    pl.BlockSpec((C, Cr), lambda b: (0, 0)),
                    pl.BlockSpec((C, 1), lambda b: (0, 0)),
                ],
                out_specs=pl.BlockSpec((1, C, HW), lambda b: (b, 0, 0)),
            ),
            compiler_params=pltpu.CompilerParams(
                dimension_semantics=("parallel",),
                vmem_limit_bytes=_vmem_limit(5 * plane_bytes + (2 << 20))),
        )(x2, w1.T, b1[None, :], w2, b2[:, None])
        return out.reshape(B, C, H, W)

    # -------- tiled two-pass fallback (plane too large to keep resident) -----
    blk_bytes = C * tile * x.dtype.itemsize

    sums = pl.pallas_call(
        ca_sum_kernel,
        out_shape=jax.ShapeDtypeStruct((B, C, 1), jnp.float32),
        grid_spec=pltpu.PrefetchScalarGridSpec(
            num_scalar_prefetch=0,
            grid=(B, HW // tile),
            in_specs=[pl.BlockSpec((1, C, tile), lambda b, q: (b, 0, q))],
            out_specs=pl.BlockSpec((1, C, 1), lambda b, q: (b, 0, 0)),
        ),
        compiler_params=pltpu.CompilerParams(
            dimension_semantics=("parallel", "arbitrary"),
            vmem_limit_bytes=_vmem_limit(4 * blk_bytes + (2 << 20))),
    )(x2)

    # Tiny (B, C) -> (B, C//r) -> (B, C) gate MLP kept as plain JAX glue.
    mean = sums[:, :, 0] * (1.0 / HW)                                # (B, C)
    h = jnp.maximum(mean @ w1.T + b1, 0.0)                           # (B, Cr)
    gate = jax.nn.sigmoid(h @ w2.T + b2).astype(x.dtype)             # (B, C)
    gate = gate[:, :, None]                                          # (B, C, 1)

    out = pl.pallas_call(
        ca_scale_kernel,
        out_shape=jax.ShapeDtypeStruct((B, C, HW), x.dtype),
        grid_spec=pltpu.PrefetchScalarGridSpec(
            num_scalar_prefetch=0,
            grid=(B, HW // tile),
            in_specs=[pl.BlockSpec((1, C, tile), lambda b, q: (b, 0, q)),
                      pl.BlockSpec((1, C, 1), lambda b, q: (b, 0, 0))],
            out_specs=pl.BlockSpec((1, C, tile), lambda b, q: (b, 0, q)),
        ),
        compiler_params=pltpu.CompilerParams(
            dimension_semantics=("parallel", "parallel"),
            vmem_limit_bytes=_vmem_limit(6 * blk_bytes + (2 << 20))),
    )(x2, gate)
    return out.reshape(B, C, H, W)


# ----------------------------- reference & test -------------------------------

def ref_channel_attention(x, w1, b1, w2, b2):
    """Pure-JAX mirror of the PyTorch ChannelAttention.forward (eval mode)."""
    m = jnp.mean(x, axis=(2, 3))                                     # (B, C)
    h = jnp.maximum(m @ w1.T + b1, 0.0)                              # (B, Cr)
    g = jax.nn.sigmoid(h @ w2.T + b2)                                # (B, C)
    return x * g[:, :, None, None]


if __name__ == "__main__":
    # Small shapes consistent with the module: default reduction_ratio=16
    # needs in_channels >= 16, so use C=64 -> hidden width 4.
    B, C, H, W = 2, 64, 16, 16
    reduction_ratio = 16
    Cr = C // reduction_ratio

    key = jax.random.PRNGKey(0)
    kx, kw1, kb1, kw2, kb2 = jax.random.split(key, 5)
    x = jax.random.normal(kx, (B, C, H, W), jnp.float32)
    w1 = jax.random.normal(kw1, (Cr, C), jnp.float32) * (1.0 / C) ** 0.5
    b1 = 0.1 * jax.random.normal(kb1, (Cr,), jnp.float32)
    w2 = jax.random.normal(kw2, (C, Cr), jnp.float32) * (1.0 / Cr) ** 0.5
    b2 = 0.1 * jax.random.normal(kb2, (C,), jnp.float32)

    fused_fn = jax.jit(channel_attention)
    tiled_fn = jax.jit(functools.partial(channel_attention,
                                         force_tiled=True, spatial_tile=128))

    out_fused = jax.block_until_ready(fused_fn(x, w1, b1, w2, b2))
    out_tiled = jax.block_until_ready(tiled_fn(x, w1, b1, w2, b2))
    ref = jax.block_until_ready(jax.jit(ref_channel_attention)(x, w1, b1, w2, b2))

    assert out_fused.shape == (B, C, H, W), out_fused.shape
    denom = float(jnp.max(jnp.abs(ref))) + 1e-6
    err_fused = float(jnp.max(jnp.abs(out_fused - ref))) / denom
    err_tiled = float(jnp.max(jnp.abs(out_tiled - ref))) / denom
    assert err_fused < 2e-3, f"fused path mismatch: rel_err={err_fused}"
    assert err_tiled < 2e-3, f"tiled path mismatch: rel_err={err_tiled}"

    print("KERNEL_OK")
</pallas_src>

<mosaic_0001>
module attributes {stable_mosaic.version = 11 : i64} {
  func.func @ca_fused_kernel(%arg0: i32, %arg1: memref<1x64x256xf32, #tpu.memory_space<vmem>>, %arg2: memref<64x4xf32, #tpu.memory_space<vmem>>, %arg3: memref<1x4xf32, #tpu.memory_space<vmem>>, %arg4: memref<64x4xf32, #tpu.memory_space<vmem>>, %arg5: memref<64x1xf32, #tpu.memory_space<vmem>>, %arg6: memref<1x64x256xf32, #tpu.memory_space<vmem>>) attributes {dimension_semantics = [#tpu.dimension_semantics<parallel>], iteration_bounds = array<i64: 2>, scalar_prefetch = 0 : i64, scratch_operands = 0 : i64, tpu.core_type = #tpu.core_type<tc>, window_params = [{transform_indices = @transform_0, window_bounds = array<i64: 1, 64, 256>}, {pipeline_mode = #tpu.pipeline_mode<synchronous>, transform_indices = @transform_1, window_bounds = array<i64: 64, 4>}, {pipeline_mode = #tpu.pipeline_mode<synchronous>, transform_indices = @transform_2, window_bounds = array<i64: 1, 4>}, {pipeline_mode = #tpu.pipeline_mode<synchronous>, transform_indices = @transform_3, window_bounds = array<i64: 64, 4>}, {pipeline_mode = #tpu.pipeline_mode<synchronous>, transform_indices = @transform_4, window_bounds = array<i64: 64, 1>}, {transform_indices = @transform_5, window_bounds = array<i64: 1, 64, 256>}]} {
    %c0 = arith.constant 0 : index
    %c0_0 = arith.constant 0 : index
    %c0_1 = arith.constant 0 : index
    %0 = vector.load %arg1[%c0, %c0_0, %c0_1] : memref<1x64x256xf32, #tpu.memory_space<vmem>>, vector<1x64x256xf32>
    %1 = vector.shape_cast %0 : vector<1x64x256xf32> to vector<64x256xf32>
    %cst = arith.constant dense<0.000000e+00> : vector<64xf32>
    %2 = vector.multi_reduction <add>, %1, %cst [1] : vector<64x256xf32> to vector<64xf32>
    %3 = vector.shape_cast %2 : vector<64xf32> to vector<64x1xf32>
    %cst_2 = arith.constant 3.906250e-03 : f32
    %4 = vector.broadcast %cst_2 : f32 to vector<64x1xf32>
    %5 = arith.mulf %3, %4 : vector<64x1xf32>
    %c0_3 = arith.constant 0 : index
    %c0_4 = arith.constant 0 : index
    %6 = vector.load %arg2[%c0_3, %c0_4] : memref<64x4xf32, #tpu.memory_space<vmem>>, vector<64x4xf32>
    %7 = vector.broadcast %5 : vector<64x1xf32> to vector<64x4xf32>
    %8 = arith.mulf %6, %7 : vector<64x4xf32>
    %cst_5 = arith.constant dense<0.000000e+00> : vector<4xf32>
    %9 = vector.multi_reduction <add>, %8, %cst_5 [0] : vector<64x4xf32> to vector<4xf32>
    %10 = vector.shape_cast %9 : vector<4xf32> to vector<1x4xf32>
    %c0_6 = arith.constant 0 : index
    %c0_7 = arith.constant 0 : index
    %11 = vector.load %arg3[%c0_6, %c0_7] : memref<1x4xf32, #tpu.memory_space<vmem>>, vector<1x4xf32>
    %12 = arith.addf %10, %11 : vector<1x4xf32>
    %cst_8 = arith.constant 0.000000e+00 : f32
    %13 = vector.broadcast %cst_8 : f32 to vector<1x4xf32>
    %14 = arith.maximumf %12, %13 : vector<1x4xf32>
    %c0_9 = arith.constant 0 : index
    %c0_10 = arith.constant 0 : index
    %15 = vector.load %arg4[%c0_9, %c0_10] : memref<64x4xf32, #tpu.memory_space<vmem>>, vector<64x4xf32>
    %16 = vector.broadcast %14 : vector<1x4xf32> to vector<64x4xf32>
    %17 = arith.mulf %15, %16 : vector<64x4xf32>
    %cst_11 = arith.constant dense<0.000000e+00> : vector<64xf32>
    %18 = vector.multi_reduction <add>, %17, %cst_11 [1] : vector<64x4xf32> to vector<64xf32>
    %19 = vector.shape_cast %18 : vector<64xf32> to vector<64x1xf32>
    %c0_12 = arith.constant 0 : index
    %c0_13 = arith.constant 0 : index
    %20 = vector.load %arg5[%c0_12, %c0_13] : memref<64x1xf32, #tpu.memory_space<vmem>>, vector<64x1xf32>
    %21 = arith.addf %19, %20 : vector<64x1xf32>
    %cst_14 = arith.constant 0.000000e+00 : f32
    %22 = vector.broadcast %cst_14 : f32 to vector<64x1xf32>
    %23 = arith.subf %22, %21 : vector<64x1xf32>
    %24 = math.exp %23 : vector<64x1xf32>
    %cst_15 = arith.constant 1.000000e+00 : f32
    %25 = vector.broadcast %cst_15 : f32 to vector<64x1xf32>
    %26 = arith.addf %25, %24 : vector<64x1xf32>
    %cst_16 = arith.constant 1.000000e+00 : f32
    %27 = vector.broadcast %cst_16 : f32 to vector<64x1xf32>
    %28 = arith.divf %27, %26 : vector<64x1xf32>
    %29 = vector.broadcast %28 : vector<64x1xf32> to vector<64x256xf32>
    %30 = arith.mulf %1, %29 : vector<64x256xf32>
    %c0_17 = arith.constant 0 : index
    %c0_18 = arith.constant 0 : index
    %c0_19 = arith.constant 0 : index
    %31 = vector.load %arg6[%c0_17, %c0_18, %c0_19] : memref<1x64x256xf32, #tpu.memory_space<vmem>>, vector<1x64x256xf32>
    %32 = vector.shape_cast %31 : vector<1x64x256xf32> to vector<64x256xf32>
    %33 = vector.shape_cast %30 : vector<64x256xf32> to vector<1x64x256xf32>
    tpu.vector_store %arg6[%c0_17, %c0_18, %c0_19], %33 {strides = array<i32>} : memref<1x64x256xf32, #tpu.memory_space<vmem>>, vector<1x64x256xf32>,
    return
  }
  func.func @transform_0(%arg0: i32) -> (i32, i32, i32) {
    %c0_i32 = arith.constant 0 : i32
    %c0_i32_0 = arith.constant 0 : i32
    %c0_i32_1 = arith.constant 0 : i32
    return %arg0, %c0_i32, %c0_i32_0 : i32, i32, i32
  }
  func.func @transform_1(%arg0: i32) -> (i32, i32) {
    %c0_i32 = arith.constant 0 : i32
    %c0_i32_0 = arith.constant 0 : i32
    %c0_i32_1 = arith.constant 0 : i32
    return %c0_i32, %c0_i32_0 : i32, i32
  }
  func.func @transform_2(%arg0: i32) -> (i32, i32) {
    %c0_i32 = arith.constant 0 : i32
    %c0_i32_0 = arith.constant 0 : i32
    %c0_i32_1 = arith.constant 0 : i32
    return %c0_i32, %c0_i32_0 : i32, i32
  }
  func.func @transform_3(%arg0: i32) -> (i32, i32) {
    %c0_i32 = arith.constant 0 : i32
    %c0_i32_0 = arith.constant 0 : i32
    %c0_i32_1 = arith.constant 0 : i32
    return %c0_i32, %c0_i32_0 : i32, i32
  }
  func.func @transform_4(%arg0: i32) -> (i32, i32) {
    %c0_i32 = arith.constant 0 : i32
    %c0_i32_0 = arith.constant 0 : i32
    %c0_i32_1 = arith.constant 0 : i32
    return %c0_i32, %c0_i32_0 : i32, i32
  }
  func.func @transform_5(%arg0: i32) -> (i32, i32, i32) {
    %c0_i32 = arith.constant 0 : i32
    %c0_i32_0 = arith.constant 0 : i32
    %c0_i32_1 = arith.constant 0 : i32
    return %arg0, %c0_i32, %c0_i32_0 : i32, i32, i32
  }
}

</mosaic_0001>

<llo_original>
// kernel: channel_attention.1
$region0: #{channel_attention.1}
  #allocation0 [shape = 'u32[]', space=smem, size = 0x4, offset = 0x4, fixed_abs, tag = 'smem constant byte address 0x4 - core index']
  #allocation1 [shape = 'u32[144,128]{1,0:T(1,128)}', space=vmem, size = 0x12000, scoped, tag = 'internal scratch']
  %s0 = inlined_call_operand.vmem [shape: f32[2,64,256], index: 0, kind: input, shape index: {}]
  %s1 = inlined_call_operand.vmem [shape: f32[64,4], index: 1, kind: input, shape index: {}]
  %s2 = inlined_call_operand.vmem [shape: f32[1,4], index: 2, kind: input, shape index: {}]
  %s3 = inlined_call_operand.vmem [shape: f32[64,4], index: 3, kind: input, shape index: {}]
  %s4 = inlined_call_operand.vmem [shape: f32[64,1], index: 4, kind: input, shape index: {}]
  %s5 = inlined_call_operand.vmem [shape: f32[2,64,256], index: 5, kind: output, shape index: {}]
  %s6 = sld [smem:[#allocation0]]
  $region53: #{channel_attention.1} parent=0
    _
  %s8 = ssub.s32 1, %s6
  %s9 = scalar_select 0, %s8, %s6
  loop: start=0, step=1, limit=4
  $region2: #{channel_attention.1} parent=0 // loop_pre_header
    _
  $region3: #{channel_attention.1} parent=0 // loop_header
    %s11 = sphi 0, %s15
    %p12 = scmp.ge.s32.totalorder %s11, 4
    %s21 = sphi 0, %s23
    %s24 = sphi 0, %s21
    %s25 = sphi 0, %s24
    %s41 = sphi 0, %s25
    %s45 = sphi 0, %s45
    %s47 = sphi 0, %s45
    %s48 = sphi 0, %s47
    %s62 = sphi 0, %s48
    %s66 = sphi 0, %s66
    %s68 = sphi 0, %s66
    %s69 = sphi 0, %s68
    %s83 = sphi 0, %s69
    %s87 = sphi 0, %s87
    %s89 = sphi 0, %s87
    %s90 = sphi 0, %s89
    %s104 = sphi 0, %s90
    %s108 = sphi 0, %s108
    %s110 = sphi 0, %s108
    %s111 = sphi 0, %s110
    %s125 = sphi 0, %s111
    %s131 = sphi 0, %s133
    %s134 = sphi 0, %s131
    %s135 = sphi 0, %s134
    %s151 = sphi 0, %s135
  $region4: #{channel_attention.1} parent=0 // loop_header_branch
    %14 = sbr.rel (%p12) target = $region8
  $region5: #{channel_attention.1} parent=0 // loop_body
    %s16 = ssub.s32 %s11, 1
    %s17 = ssub.s32 %s11, 2
    %s18 = sadd.s32 %s11, 1
    %s19 = ssub.s32 %s11, %s18
    %p20 = scmp.eq.s32.totalorder %s19, 0
    %s22 = sadd.s32 %s21, 1
    %s23 = scalar_select %p20, %s21, %s22
    %p26 = pneg %p20
    %p27 = scmp.eq.s32.totalorder %s11, 1
    %p28 = por %p26, %p27
    %p29 = scmp.ne.s32.totalorder %s21, %s24
    %p30 = scmp.eq.s32.totalorder %s11, 0
    %p31 = por %p29, %p30
    %p32 = scmp.ne.s32.totalorder %s21, %s24
    %p33 = scmp.eq.s32.totalorder %s16, 1
    %p34 = por %p32, %p33
    %p35 = scmp.ne.s32.totalorder %s24, %s25
    %p36 = scmp.eq.s32.totalorder %s16, 0
    %p37 = por %p35, %p36
    %p38 = scmp.ne.s32.totalorder %s24, %s25
    %p39 = scmp.eq.s32.totalorder %s17, 1
    %p40 = por %p38, %p39
    %p42 = scmp.ne.s32.totalorder %s25, %s41
    %p43 = scmp.eq.s32.totalorder %s17, 0
    %p44 = por %p42, %p43
    %s46 = sadd.s32 %s45, 1
    %p49 = scmp.eq.s32.totalorder %s11, 1
    %p50 = scmp.ne.s32.totalorder %s45, %s47
    %p51 = scmp.eq.s32.totalorder %s11, 0
    %p52 = por %p50, %p51
    %p53 = scmp.ne.s32.totalorder %s45, %s47
    %p54 = scmp.eq.s32.totalorder %s16, 1
    %p55 = por %p53, %p54
    %p56 = scmp.ne.s32.totalorder %s47, %s48
    %p57 = scmp.eq.s32.totalorder %s16, 0
    %p58 = por %p56, %p57
    %p59 = scmp.ne.s32.totalorder %s47, %s48
    %p60 = scmp.eq.s32.totalorder %s17, 1
    %p61 = por %p59, %p60
    %p63 = scmp.ne.s32.totalorder %s48, %s62
    %p64 = scmp.eq.s32.totalorder %s17, 0
    %p65 = por %p63, %p64
    %s67 = sadd.s32 %s66, 1
    %p70 = scmp.eq.s32.totalorder %s11, 1
    %p71 = scmp.ne.s32.totalorder %s66, %s68
    %p72 = scmp.eq.s32.totalorder %s11, 0
    %p73 = por %p71, %p72
    %p74 = scmp.ne.s32.totalorder %s66, %s68
    %p75 = scmp.eq.s32.totalorder %s16, 1
    %p76 = por %p74, %p75
    %p77 = scmp.ne.s32.totalorder %s68, %s69
    %p78 = scmp.eq.s32.totalorder %s16, 0
    %p79 = por %p77, %p78
    %p80 = scmp.ne.s32.totalorder %s68, %s69
    %p81 = scmp.eq.s32.totalorder %s17, 1
    %p82 = por %p80, %p81
    %p84 = scmp.ne.s32.totalorder %s69, %s83
    %p85 = scmp.eq.s32.totalorder %s17, 0
    %p86 = por %p84, %p85
    %s88 = sadd.s32 %s87, 1
    %p91 = scmp.eq.s32.totalorder %s11, 1
    %p92 = scmp.ne.s32.totalorder %s87, %s89
    %p93 = scmp.eq.s32.totalorder %s11, 0
    %p94 = por %p92, %p93
    %p95 = scmp.ne.s32.totalorder %s87, %s89
    %p96 = scmp.eq.s32.totalorder %s16, 1
    %p97 = por %p95, %p96
    %p98 = scmp.ne.s32.totalorder %s89, %s90
    %p99 = scmp.eq.s32.totalorder %s16, 0
    %p100 = por %p98, %p99
    %p101 = scmp.ne.s32.totalorder %s89, %s90
    %p102 = scmp.eq.s32.totalorder %s17, 1
    %p103 = por %p101, %p102
    %p105 = scmp.ne.s32.totalorder %s90, %s104
    %p106 = scmp.eq.s32.totalorder %s17, 0
    %p107 = por %p105, %p106
    %s109 = sadd.s32 %s108, 1
    %p112 = scmp.eq.s32.totalorder %s11, 1
    %p113 = scmp.ne.s32.totalorder %s108, %s110
    %p114 = scmp.eq.s32.totalorder %s11, 0
    %p115 = por %p113, %p114
    %p116 = scmp.ne.s32.totalorder %s108, %s110
    %p117 = scmp.eq.s32.totalorder %s16, 1
    %p118 = por %p116, %p117
    %p119 = scmp.ne.s32.totalorder %s110, %s111
    %p120 = scmp.eq.s32.totalorder %s16, 0
    %p121 = por %p119, %p120
    %p122 = scmp.ne.s32.totalorder %s110, %s111
    %p123 = scmp.eq.s32.totalorder %s17, 1
    %p124 = por %p122, %p123
    %p126 = scmp.ne.s32.totalorder %s111, %s125
    %p127 = scmp.eq.s32.totalorder %s17, 0
    %p128 = por %p126, %p127
    %s129 = ssub.s32 %s11, %s18
    %p130 = scmp.eq.s32.totalorder %s129, 0
    %s132 = sadd.s32 %s131, 1
    %s133 = scalar_select %p130, %s131, %s132
    %p136 = pneg %p130
    %p137 = scmp.eq.s32.totalorder %s11, 1
    %p138 = por %p136, %p137
    %p139 = scmp.ne.s32.totalorder %s131, %s134
    %p140 = scmp.eq.s32.totalorder %s11, 0
    %p141 = por %p139, %p140
    %p142 = scmp.ne.s32.totalorder %s131, %s134
    %p143 = scmp.eq.s32.totalorder %s16, 1
    %p144 = por %p142, %p143
    %p145 = scmp.ne.s32.totalorder %s134, %s135
    %p146 = scmp.eq.s32.totalorder %s16, 0
    %p147 = por %p145, %p146
    %p148 = scmp.ne.s32.totalorder %s134, %s135
    %p149 = scmp.eq.s32.totalorder %s17, 1
    %p150 = por %p148, %p149
    %p152 = scmp.ne.s32.totalorder %s135, %s151
    %p153 = scmp.eq.s32.totalorder %s17, 0
    %p154 = por %p152, %p153
    %p155 = scmp.le.s32.totalorder 1, %s11
    %p156 = scmp.lt.s32.totalorder %s11, 3
    %p157 = pnand %p155, %p156
    %p158 = pneg %p157
    // Predicated region
    $region9: #{channel_attention.1} parent=5 // pred_check
      _
    $region10: #{channel_attention.1} parent=5 // pred_check_branch
      %160 = sbr.rel (%p157) target = $region12
    $region11: #{channel_attention.1} parent=5 // pred_region
      %s161 = ssub.s32 %s11, 1
      // Predicated region
      $region13: #{channel_attention.1} parent=11 // pred_check
        %p162 = pneg %p58
      $region14: #{channel_attention.1} parent=11 // pred_check_branch
        %164 = sbr.rel (%p162) target = $region16
      $region15: #{channel_attention.1} parent=11 // pred_region
        _
      $region16: #{channel_attention.1} parent=11 // pred_fallthru
        _
      // Predicated region
      $region17: #{channel_attention.1} parent=11 // pred_check
        %p165 = pneg %p79
      $region18: #{channel_attention.1} parent=11 // pred_check_branch
        %167 = sbr.rel (%p165) target = $region20
      $region19: #{channel_attention.1} parent=11 // pred_region
        _
      $region20: #{channel_attention.1} parent=11 // pred_fallthru
        _
      // Predicated region
      $region21: #{channel_attention.1} parent=11 // pred_check
        %p168 = pneg %p100
      $region22: #{channel_attention.1} parent=11 // pred_check_branch
        %170 = sbr.rel (%p168) target = $region24
      $region23: #{channel_attention.1} parent=11 // pred_region
        _
      $region24: #{channel_attention.1} parent=11 // pred_fallthru
        _
      // Predicated region
      $region25: #{channel_attention.1} parent=11 // pred_check
        %p171 = pneg %p121
      $region26: #{channel_attention.1} parent=11 // pred_check_branch
        %173 = sbr.rel (%p171) target = $region28
      $region27: #{channel_attention.1} parent=11 // pred_region
        _
      $region28: #{channel_attention.1} parent=11 // pred_fallthru
        _
    $region12: #{channel_attention.1} parent=5 // pred_fallthru
      _
    %p174 = scmp.lt.s32.totalorder %s11, 2
    // Predicated region
    $region29: #{channel_attention.1} parent=5 // pred_check
      %p175 = pneg %p174
    $region30: #{channel_attention.1} parent=5 // pred_check_branch
      %177 = sbr.rel (%p175) target = $region32
    $region31: #{channel_attention.1} parent=5 // pred_region
      // Predicated region
      $region33: #{channel_attention.1} parent=31 // pred_check
        %p178 = pneg %p31
      $region34: #{channel_attention.1} parent=31 // pred_check_branch
        %180 = sbr.rel (%p178) target = $region36
      $region35: #{channel_attention.1} parent=31 // pred_region
        %p181 = scmp.lt.s32.totalorder %s11, 1
        %s182 = scalar_select %p181, %s11, 1
        %s183 = smul.addr %s182, 16
        %s184 = smul.addr %s183, 8
        %s185 = scalar_lea.vmem %s0, %s184
      $region36: #{channel_attention.1} parent=31 // pred_fallthru
        _
    $region32: #{channel_attention.1} parent=5 // pred_fallthru
      _
    %p186 = scmp.le.s32.totalorder 1, %s11
    %p187 = scmp.lt.s32.totalorder %s11, 3
    %p188 = pnand %p186, %p187
    %p189 = pneg %p188
    // Predicated region
    $region37: #{channel_attention.1} parent=5 // pred_check
      _
    $region38: #{channel_attention.1} parent=5 // pred_check_branch
      %191 = sbr.rel (%p188) target = $region40
    $region39: #{channel_attention.1} parent=5 // pred_region
      %s192 = ssub.s32 %s11, 1
      %p193 = scmp.lt.s32.totalorder %s16, 1
      %s194 = scalar_select %p193, %s16, 1
      %s195 = smul.addr %s194, 16
      %s196 = smul.addr %s195, 8
      %s197 = scalar_lea.vmem %s0, %s196
      %p198 = pneg %p37
      %p199 = pneg %p34
      %p200 = pneg %p58
      %p201 = pneg %p55
      %p202 = pneg %p79
      %p203 = pneg %p76
      %p204 = pneg %p100
      %p205 = pneg %p97
      %p206 = pneg %p121
      %p207 = pneg %p118
      %p208 = pneg %p147
      %p209 = pneg %p144
      %p210 = scmp.lt.s32.totalorder %s16, 1
      %s211 = scalar_select %p210, %s16, 1
      %s212 = smul.addr %s211, 16
      %s213 = smul.addr %s212, 8
      %s214 = scalar_lea.vmem %s5, %s213
      %p215 = scmp.lt.s32.totalorder %s16, 1
      %s216 = scalar_select %p215, %s16, 1
      %s217 = smul.addr %s216, 16
      %s218 = smul.addr %s217, 8
      %s219 = scalar_lea.vmem %s0, %s218
      %p220 = scmp.lt.s32.totalorder %s16, 1
      %s221 = scalar_select %p220, %s16, 1
      %s222 = smul.addr %s221, 16
      %s223 = smul.addr %s222, 8
      %s224 = scalar_lea.vmem %s5, %s223
      %v225 = vld [vmem:[%s219] sm:$0xff]
      %v226 = vld [vmem:[%s219 + $0x8] sm:$0xff]
      %v227 = vld [vmem:[%s219 + $0x10] sm:$0xff]
      %v228 = vld [vmem:[%s219 + $0x18] sm:$0xff]
      %v229 = vld [vmem:[%s219 + $0x20] sm:$0xff]
      %v230 = vld [vmem:[%s219 + $0x28] sm:$0xff]
      %v231 = vld [vmem:[%s219 + $0x30] sm:$0xff]
      %v232 = vld [vmem:[%s219 + $0x38] sm:$0xff]
      %v233 = vld [vmem:[%s219 + $0x40] sm:$0xff]
      %v234 = vld [vmem:[%s219 + $0x48] sm:$0xff]
      %v235 = vld [vmem:[%s219 + $0x50] sm:$0xff]
      %v236 = vld [vmem:[%s219 + $0x58] sm:$0xff]
      %v237 = vld [vmem:[%s219 + $0x60] sm:$0xff]
      %v238 = vld [vmem:[%s219 + $0x68] sm:$0xff]
      %v239 = vld [vmem:[%s219 + $0x70] sm:$0xff]
      %v240 = vld [vmem:[%s219 + $0x78] sm:$0xff]
      %v241 = vadd.f32 %v225, %v226
      %242 = vadd.xlane.f32.xlu0 %v241
      %v243 = vpop.xlane.xlu0 %242
      %v244 = vadd.f32 %v227, %v228
      %245 = vadd.xlane.f32.xlu0 %v244
      %v246 = vpop.xlane.xlu0 %245
      %v247 = vadd.f32 %v229, %v230
      %248 = vadd.xlane.f32.xlu0 %v247
      %v249 = vpop.xlane.xlu0 %248
      %v250 = vadd.f32 %v231, %v232
      %251 = vadd.xlane.f32.xlu0 %v250
      %v252 = vpop.xlane.xlu0 %251
      %v253 = vadd.f32 %v233, %v234
      %254 = vadd.xlane.f32.xlu0 %v253
      %v255 = vpop.xlane.xlu0 %254
      %v256 = vadd.f32 %v235, %v236
      %257 = vadd.xlane.f32.xlu0 %v256
      %v258 = vpop.xlane.xlu0 %257
      %v259 = vadd.f32 %v237, %v238
      %260 = vadd.xlane.f32.xlu0 %v259
      %v261 = vpop.xlane.xlu0 %260
      %v262 = vadd.f32 %v239, %v240
      %263 = vadd.xlane.f32.xlu0 %v262
      %v264 = vpop.xlane.xlu0 %263
      %v265 = vmul.f32 %v243, 0.00390625
      %v266 = vmul.f32 %v246, 0.00390625
      %v267 = vmul.f32 %v249, 0.00390625
      %v268 = vmul.f32 %v252, 0.00390625
      %v269 = vmul.f32 %v255, 0.00390625
      %v270 = vmul.f32 %v258, 0.00390625
      %v271 = vmul.f32 %v261, 0.00390625
      %v272 = vmul.f32 %v264, 0.00390625
      %v273 = vld [vmem:[%s1] sm:$0xff]
      %v274 = vld [vmem:[%s1 + $0x8] sm:$0xff]
      %v275 = vld [vmem:[%s1 + $0x10] sm:$0xff]
      %v276 = vld [vmem:[%s1 + $0x18] sm:$0xff]
      %v277 = vld [vmem:[%s1 + $0x20] sm:$0xff]
      %v278 = vld [vmem:[%s1 + $0x28] sm:$0xff]
      %v279 = vld [vmem:[%s1 + $0x30] sm:$0xff]
      %v280 = vld [vmem:[%s1 + $0x38] sm:$0xff]
      %v281 = vmul.f32 %v273, %v265
      %v282 = vmul.f32 %v274, %v266
      %v283 = vmul.f32 %v275, %v267
      %v284 = vmul.f32 %v276, %v268
      %v285 = vmul.f32 %v277, %v269
      %v286 = vmul.f32 %v278, %v270
      %v287 = vmul.f32 %v279, %v271
      %v288 = vmul.f32 %v280, %v272
      %vm289 = vcmask 31744
      %v290 = vsel %vm289, %v281, 0.0
      %v291 = vsel %vm289, %v282, 0.0
      %v292 = vadd.f32 %v290, %v291
      %v293 = vsel %vm289, %v283, 0.0
      %v294 = vadd.f32 %v292, %v293
      %v295 = vsel %vm289, %v284, 0.0
      %v296 = vadd.f32 %v294, %v295
      %v297 = vsel %vm289, %v285, 0.0
      %v298 = vadd.f32 %v296, %v297
      %v299 = vsel %vm289, %v286, 0.0
      %v300 = vadd.f32 %v298, %v299
      %v301 = vsel %vm289, %v287, 0.0
      %v302 = vadd.f32 %v300, %v301
      %v303 = vsel %vm289, %v288, 0.0
      %v304 = vadd.f32 %v302, %v303
      %v305 = vrot.slane %v304, 4
      %v306 = vadd.f32 %v304, %v305
      %v307 = vrot.slane %v306, 2
      %v308 = vadd.f32 %v306, %v307
      %v309 = vrot.slane %v308, 1
      %v310 = vadd.f32 %v308, %v309
      %v311 = vld [vmem:[%s2] sm:$0x1]
      %v312 = vadd.f32 %v310, %v311
      %v313 = vmax.f32 %v312, 0.0
      %v314 = vld [vmem:[%s3] sm:$0xff]
      %v315 = vld [vmem:[%s3 + $0x8] sm:$0xff]
      %v316 = vld [vmem:[%s3 + $0x10] sm:$0xff]
      %v317 = vld [vmem:[%s3 + $0x18] sm:$0xff]
      %v318 = vld [vmem:[%s3 + $0x20] sm:$0xff]
      %v319 = vld [vmem:[%s3 + $0x28] sm:$0xff]
      %v320 = vld [vmem:[%s3 + $0x30] sm:$0xff]
      %v321 = vld [vmem:[%s3 + $0x38] sm:$0xff]
      %v322 = vlaneseq
      %v323 = vshrl.u32 %v322, 7
      %v324 = vsub.s32 0, %v323
      %v325 = vrot.slane %v313, %v324
      %v326 = vmul.f32 %v314, %v325
      %v327 = vmul.f32 %v315, %v325
      %v328 = vmul.f32 %v316, %v325
      %v329 = vmul.f32 %v317, %v325
      %v330 = vmul.f32 %v318, %v325
      %v331 = vmul.f32 %v319, %v325
      %v332 = vmul.f32 %v320, %v325
      %v333 = vmul.f32 %v321, %v325
      %v334 = vsel %vm289, %v326, 0.0
      %335 = vadd.xlane.f32.xlu0 %v334
      %v336 = vpop.xlane.xlu0 %335
      %v337 = vsel %vm289, %v327, 0.0
      %338 = vadd.xlane.f32.xlu0 %v337
      %v339 = vpop.xlane.xlu0 %338
      %v340 = vsel %vm289, %v328, 0.0
      %341 = vadd.xlane.f32.xlu0 %v340
      %v342 = vpop.xlane.xlu0 %341
      %v343 = vsel %vm289, %v329, 0.0
      %344 = vadd.xlane.f32.xlu0 %v343
      %v345 = vpop.xlane.xlu0 %344
      %v346 = vsel %vm289, %v330, 0.0
      %347 = vadd.xlane.f32.xlu0 %v346
      %v348 = vpop.xlane.xlu0 %347
      %v349 = vsel %vm289, %v331, 0.0
      %350 = vadd.xlane.f32.xlu0 %v349
      %v351 = vpop.xlane.xlu0 %350
      %v352 = vsel %vm289, %v332, 0.0
      %353 = vadd.xlane.f32.xlu0 %v352
      %v354 = vpop.xlane.xlu0 %353
      %v355 = vsel %vm289, %v333, 0.0
      %356 = vadd.xlane.f32.xlu0 %v355
      %v357 = vpop.xlane.xlu0 %356
      %v358 = vld [vmem:[%s4] sm:$0xff]
      %v359 = vld [vmem:[%s4 + $0x8] sm:$0xff]
      %v360 = vld [vmem:[%s4 + $0x10] sm:$0xff]
      %v361 = vld [vmem:[%s4 + $0x18] sm:$0xff]
      %v362 = vld [vmem:[%s4 + $0x20] sm:$0xff]
      %v363 = vld [vmem:[%s4 + $0x28] sm:$0xff]
      %v364 = vld [vmem:[%s4 + $0x30] sm:$0xff]
      %v365 = vld [vmem:[%s4 + $0x38] sm:$0xff]
      %v366 = vadd.f32 %v336, %v358
      %v367 = vadd.f32 %v339, %v359
      %v368 = vadd.f32 %v342, %v360
      %v369 = vadd.f32 %v345, %v361
      %v370 = vadd.f32 %v348, %v362
      %v371 = vadd.f32 %v351, %v363
      %v372 = vadd.f32 %v354, %v364
      %v373 = vadd.f32 %v357, %v365
      %v374 = vsub.f32 0.0, %v366
      %v375 = vsub.f32 0.0, %v367
      %v376 = vsub.f32 0.0, %v368
      %v377 = vsub.f32 0.0, %v369
      %v378 = vsub.f32 0.0, %v370
      %v379 = vsub.f32 0.0, %v371
      %v380 = vsub.f32 0.0, %v372
      %v381 = vsub.f32 0.0, %v373
      %v382 = vmul.f32 %v374, 1.442695
      %v383 = vpow.pop %v382
      %v384 = vmul.f32 %v375, 1.442695
      %v385 = vpow.pop %v384
      %v386 = vmul.f32 %v376, 1.442695
      %v387 = vpow.pop %v386
      %v388 = vmul.f32 %v377, 1.442695
      %v389 = vpow.pop %v388
      %v390 = vmul.f32 %v378, 1.442695
      %v391 = vpow.pop %v390
      %v392 = vmul.f32 %v379, 1.442695
      %v393 = vpow.pop %v392
      %v394 = vmul.f32 %v380, 1.442695
      %v395 = vpow.pop %v394
      %v396 = vmul.f32 %v381, 1.442695
      %v397 = vpow.pop %v396
      %v398 = vadd.f32 %v383, 1.0
      %v399 = vadd.f32 %v385, 1.0
      %v400 = vadd.f32 %v387, 1.0
      %v401 = vadd.f32 %v389, 1.0
      %v402 = vadd.f32 %v391, 1.0
      %v403 = vadd.f32 %v393, 1.0
      %v404 = vadd.f32 %v395, 1.0
      %v405 = vadd.f32 %v397, 1.0
      %v406 = vrcp.pop %v398
      %v407 = vmul.f32 1.0, %v406
      %v408 = vrcp.pop %v399
      %v409 = vmul.f32 1.0, %v408
      %v410 = vrcp.pop %v400
      %v411 = vmul.f32 1.0, %v410
      %v412 = vrcp.pop %v401
      %v413 = vmul.f32 1.0, %v412
      %v414 = vrcp.pop %v402
      %v415 = vmul.f32 1.0, %v414
      %v416 = vrcp.pop %v403
      %v417 = vmul.f32 1.0, %v416
      %v418 = vrcp.pop %v404
      %v419 = vmul.f32 1.0, %v418
      %v420 = vrcp.pop %v405
      %v421 = vmul.f32 1.0, %v420
      %423 = vset.pattern.permute.xlu0 0
      %424 = vperm.xlu0 %423, %v407
      %v425 = vpop.permute.xlu0 %424
      %428 = vset.pattern.permute.xlu0 0
      %429 = vperm.xlu0 %428, %v409
      %v430 = vpop.permute.xlu0 %429
      %433 = vset.pattern.permute.xlu0 0
      %434 = vperm.xlu0 %433, %v411
      %v435 = vpop.permute.xlu0 %434
      %438 = vset.pattern.permute.xlu0 0
      %439 = vperm.xlu0 %438, %v413
      %v440 = vpop.permute.xlu0 %439
      %443 = vset.pattern.permute.xlu0 0
      %444 = vperm.xlu0 %443, %v415
      %v445 = vpop.permute.xlu0 %444
      %448 = vset.pattern.permute.xlu0 0
      %449 = vperm.xlu0 %448, %v417
      %v450 = vpop.permute.xlu0 %449
      %453 = vset.pattern.permute.xlu0 0
      %454 = vperm.xlu0 %453, %v419
      %v455 = vpop.permute.xlu0 %454
      %458 = vset.pattern.permute.xlu0 0
      %459 = vperm.xlu0 %458, %v421
      %v460 = vpop.permute.xlu0 %459
      %v462 = vmul.f32 %v225, %v425
      %v463 = vmul.f32 %v226, %v425
      %v464 = vmul.f32 %v227, %v430
      %v465 = vmul.f32 %v228, %v430
      %v466 = vmul.f32 %v229, %v435
      %v467 = vmul.f32 %v230, %v435
      %v468 = vmul.f32 %v231, %v440
      %v469 = vmul.f32 %v232, %v440
      %v470 = vmul.f32 %v233, %v445
      %v471 = vmul.f32 %v234, %v445
      %v472 = vmul.f32 %v235, %v450
      %v473 = vmul.f32 %v236, %v450
      %v474 = vmul.f32 %v237, %v455
      %v475 = vmul.f32 %v238, %v455
      %v476 = vmul.f32 %v239, %v460
      %v477 = vmul.f32 %v240, %v460
      %478 = vst [vmem:[%s224] sm:$0xff] %v462
      %479 = vst [vmem:[%s224 + $0x8] sm:$0xff] %v463
      %480 = vst [vmem:[%s224 + $0x10] sm:$0xff] %v464
      %481 = vst [vmem:[%s224 + $0x18] sm:$0xff] %v465
      %482 = vst [vmem:[%s224 + $0x20] sm:$0xff] %v466
      %483 = vst [vmem:[%s224 + $0x28] sm:$0xff] %v467
      %484 = vst [vmem:[%s224 + $0x30] sm:$0xff] %v468
      %485 = vst [vmem:[%s224 + $0x38] sm:$0xff] %v469
      %486 = vst [vmem:[%s224 + $0x40] sm:$0xff] %v470
      %487 = vst [vmem:[%s224 + $0x48] sm:$0xff] %v471
      %488 = vst [vmem:[%s224 + $0x50] sm:$0xff] %v472
      %489 = vst [vmem:[%s224 + $0x58] sm:$0xff] %v473
      %490 = vst [vmem:[%s224 + $0x60] sm:$0xff] %v474
      %491 = vst [vmem:[%s224 + $0x68] sm:$0xff] %v475
      %492 = vst [vmem:[%s224 + $0x70] sm:$0xff] %v476
      %493 = vst [vmem:[%s224 + $0x78] sm:$0xff] %v477
      %p494 = scmp.lt.s32.totalorder %s16, 1
      %s495 = scalar_select %p494, %s16, 1
      %s496 = smul.addr %s495, 16
      %s497 = smul.addr %s496, 8
      %s498 = scalar_lea.vmem %s5, %s497
      // Predicated region
      $region41: #{channel_attention.1} parent=39 // pred_check
        %p499 = pneg %p144
      $region42: #{channel_attention.1} parent=39 // pred_check_branch
        %501 = sbr.rel (%p499) target = $region44
      $region43: #{channel_attention.1} parent=39 // pred_region
        _
      $region44: #{channel_attention.1} parent=39 // pred_fallthru
        _
    $region40: #{channel_attention.1} parent=5 // pred_fallthru
      _
    %p502 = scmp.le.s32.totalorder 2, %s11
    // Predicated region
    $region45: #{channel_attention.1} parent=5 // pred_check
      %p503 = pneg %p502
    $region46: #{channel_attention.1} parent=5 // pred_check_branch
      %505 = sbr.rel (%p503) target = $region48
    $region47: #{channel_attention.1} parent=5 // pred_region
      %s506 = ssub.s32 %s11, 2
      // Predicated region
      $region49: #{channel_attention.1} parent=47 // pred_check
        %p507 = pneg %p150
      $region50: #{channel_attention.1} parent=47 // pred_check_branch
        %509 = sbr.rel (%p507) target = $region52
      $region51: #{channel_attention.1} parent=47 // pred_region
        %p510 = scmp.lt.s32.totalorder %s17, 1
        %s511 = scalar_select %p510, %s17, 1
        %s512 = smul.addr %s511, 16
        %s513 = smul.addr %s512, 8
        %s514 = scalar_lea.vmem %s5, %s513
      $region52: #{channel_attention.1} parent=47 // pred_fallthru
        _
    $region48: #{channel_attention.1} parent=5 // pred_fallthru
      _
  $region6: #{channel_attention.1} parent=0 // loop_footer
    %s15 = sadd.s32 1, %s11
  $region7: #{channel_attention.1} parent=0 // loop_footer_branch
    %10 = sbr.rel target = $region3
  $region8: #{channel_attention.1} parent=0 // loop_exit
    _

</llo_original>
